<compile_context>
chip_gen: v7x
topology: tpu7x:2x2x1
jax: 0.10.0
libtpu: 0.0.40
codegen_flags: <defaults>
</compile_context>

<pallas_src>
import math

import jax
import jax.numpy as jnp
from jax.experimental import pallas as pl
from jax.experimental.pallas import tpu as pltpu

LANE = 128


def _drop_path_kernel(scale_ref, x_ref, o_ref):
    # scale_ref: (rows, 1) per-sample scale (0.0 or 1/keep_prob), in x.dtype
    # x_ref/o_ref: (rows, block_n) tile of the flattened input / output
    o_ref[...] = x_ref[...] * scale_ref[...]


def _sublane_pack(dtype) -> int:
    """Rows per physical sublane tile: 8 for 4-byte, 16 for 2-byte, 32 for 1-byte."""
    itemsize = jnp.dtype(dtype).itemsize
    return max(8, 32 // max(1, itemsize))


def _round_up(x: int, m: int) -> int:
    return ((x + m - 1) // m) * m


def _round_down(x: int, m: int) -> int:
    return (x // m) * m


def _block_data_target_bytes() -> int:
    """Per-block physical (padded) byte target, generation-aware."""
    kind = ""
    try:
        kind = jax.devices()[0].device_kind.lower()
    except Exception:  # pragma: no cover - defensive; fall back to conservative size
        pass
    if "v7" in kind:
        # ~3.2 TB/s HBM: keep per-step overhead <10%; 4x-buffered ~24 MiB < 32 MiB default.
        return 6 * 1024 * 1024
    if "v6" in kind:
        # 4x-buffered ~16 MiB < 32 MiB scoped default.
        return 4 * 1024 * 1024
    # v5e / unknown: 4x-buffered ~8 MiB < 16 MiB scoped-VMEM default.
    return 2 * 1024 * 1024


def _choose_block_n(rows: int, n: int, dtype) -> int:
    """Pick block_n (multiple of 128) using physical (sublane-padded) VMEM accounting,
    guaranteeing >= 2 grid steps whenever n > 128."""
    itemsize = jnp.dtype(dtype).itemsize
    padded_rows = _round_up(rows, _sublane_pack(dtype))

    if n <= LANE:
        return n  # single tiny full block; nothing to pipeline

    target = _block_data_target_bytes()
    tn = target // max(1, padded_rows * itemsize)
    tn = max(LANE, _round_down(tn, LANE))

    # Never collapse to a 1-step grid: cap at ~n/2 (rounded to 128, min 128) so
    # DMA-in / compute / DMA-out pipeline and v7x dual-TC sharding has work.
    half = max(LANE, _round_down(pl.cdiv(n, 2), LANE))
    tn = min(tn, half)

    # Prefer an even step count (dual-TC load balance) when cheaply achievable.
    steps = pl.cdiv(n, tn)
    if steps > 1 and steps % 2 == 1:
        cand = _round_up(pl.cdiv(n, steps + 1), LANE)
        if cand >= LANE and pl.cdiv(n, cand) % 2 == 0:
            tn = cand
    return tn


def _run_drop_path_kernel(x_flat, scale_col, block_n, donate_x=False):
    rows, n = x_flat.shape
    itemsize = jnp.dtype(x_flat.dtype).itemsize
    grid = (pl.cdiv(n, block_n),)

    kwargs = {}
    if donate_x:
        # x_flat is input index 1 -> alias to the single output buffer.
        # Only a true alias if x is donated at the jit boundary; reduces
        # footprint, not HBM traffic.
        kwargs["input_output_aliases"] = {1: 0}

    cost = pl.CostEstimate(
        flops=rows * n,  # one multiply per element
        transcendentals=0,
        bytes_accessed=2 * rows * n * itemsize + rows * jnp.dtype(scale_col.dtype).itemsize,
    )

    return pl.pallas_call(
        _drop_path_kernel,
        out_shape=jax.ShapeDtypeStruct((rows, n), x_flat.dtype),
        grid_spec=pl.GridSpec(
            grid=grid,
            in_specs=[
                pl.BlockSpec((rows, 1), lambda i: (0, 0)),          # per-sample scale
                pl.BlockSpec((rows, block_n), lambda i: (0, i)),    # x tile
            ],
            out_specs=pl.BlockSpec((rows, block_n), lambda i: (0, i)),
        ),
        compiler_params=pltpu.CompilerParams(
            dimension_semantics=("parallel",),
        ),
        cost_estimate=cost,
        **kwargs,
    )(scale_col, x_flat)


def drop_path(x, drop_prob: float = 0.0, training: bool = False,
              scale_by_keep: bool = True, *, key=None, block_n=None,
              donate_x=False):
    """JAX/Pallas equivalent of timm's drop_path (PoolFormer DropPath.forward)."""
    if drop_prob == 0.0 or not training:
        return x
    if key is None:
        raise ValueError(
            "drop_path with drop_prob > 0 in training mode requires an explicit "
            "PRNG key (a fixed default seed would make stochastic depth "
            "deterministic across layers/steps).")

    keep_prob = 1.0 - drop_prob
    B = x.shape[0]

    # Per-sample Bernoulli(keep_prob) mask in x.dtype (matches timm, which
    # builds random_tensor with x.new_empty and divides in x.dtype).
    mask = jax.random.bernoulli(key, p=keep_prob, shape=(B, 1))
    scale = mask.astype(x.dtype)
    if keep_prob > 0.0 and scale_by_keep:
        scale = scale / jnp.asarray(keep_prob, dtype=x.dtype)

    orig_shape = x.shape
    n = 1
    for d in orig_shape[1:]:
        n *= d
    if n == 0:
        return x

    # Sublane repacking: (B, n) -> (B*R, n/R) so the sublane dim is a multiple
    # of the physical pack (8/16/32).  Each sample b owns R consecutive rows;
    # its scale is repeated R times so the broadcast-multiply stays per-sample.
    pack = _sublane_pack(x.dtype)
    repeat = 1
    if B % pack != 0:
        r = pack // math.gcd(B, pack)
        if r > 1 and n % r == 0:
            repeat = r
    rows = B * repeat
    n_eff = n // repeat

    x_flat = x.reshape(rows, n_eff)  # view-style reshape; no pad, no extra HBM pass
    scale_rows = jnp.repeat(scale, repeat, axis=0) if repeat > 1 else scale

    if block_n is None:
        block_n = _choose_block_n(rows, n_eff, x.dtype)

    out = _run_drop_path_kernel(x_flat, scale_rows, block_n, donate_x=donate_x)
    return out.reshape(orig_shape)


class DropPath:
    """Drop paths (stochastic depth) per sample."""

    def __init__(self, drop_prob: float = 0.0, scale_by_keep: bool = True):
        self.drop_prob = drop_prob
        self.scale_by_keep = scale_by_keep
        self.training = True

    def __call__(self, x, key=None):
        return drop_path(x, self.drop_prob, self.training,
                         self.scale_by_keep, key=key)


if __name__ == "__main__":
    key = jax.random.PRNGKey(0)
    keys = jax.random.split(key, 10)
    k_x, k_mask, k_x2, k_mask2, k_x3, k_mask3, k_x4, k_mask4, k_x5, k_mask5 = keys

    def ref_drop_path(x, mask_key, drop_prob, scale_by_keep=True):
        keep_prob = 1.0 - drop_prob
        mask = jax.random.bernoulli(mask_key, p=keep_prob, shape=(x.shape[0], 1))
        scale = mask.astype(x.dtype)
        if keep_prob > 0.0 and scale_by_keep:
            scale = scale / jnp.asarray(keep_prob, dtype=x.dtype)
        bshape = (x.shape[0],) + (1,) * (x.ndim - 1)
        return x * scale.reshape(bshape)

    # 1) NCHW f32 matching the spec: B=2, C=4, H=W=16 -> n=1024.
    #    Exercises sublane repack (rows=8, n_eff=256) and a 2-step grid.
    x = jax.random.normal(k_x, (2, 4, 16, 16), dtype=jnp.float32)
    module = DropPath(drop_prob=0.25, scale_by_keep=True)
    module.training = True
    y = jax.block_until_ready(module(x, key=k_mask))
    y_ref = ref_drop_path(x, k_mask, 0.25)
    assert jnp.allclose(y, y_ref, atol=1e-6), "mismatch vs reference (repacked, 2-step)"

    # 2) Repacked + ragged lanes: (2, 3, 20, 20) -> n=1200, rows=8, n_eff=300,
    #    block_n=128 with a masked partial edge block.
    x2 = jax.random.normal(k_x2, (2, 3, 20, 20), dtype=jnp.float32)
    y2 = jax.block_until_ready(drop_path(x2, 0.25, True, True, key=k_mask2))
    y2_ref = ref_drop_path(x2, k_mask2, 0.25)
    assert jnp.allclose(y2, y2_ref, atol=1e-6), "ragged-tail mismatch"

    # 3) Batch already sublane-aligned (no repack): B=16.
    x3 = jax.random.normal(k_x3, (16, 4, 16, 16), dtype=jnp.float32)
    y3 = jax.block_until_ready(drop_path(x3, 0.25, True, True, key=k_mask3))
    y3_ref = ref_drop_path(x3, k_mask3, 0.25)
    assert jnp.allclose(y3, y3_ref, atol=1e-6), "aligned-batch mismatch"

    # 4) bf16 path (pack=16 -> rows=16, n_eff=128, single tiny block).
    x4 = jax.random.normal(k_x4, (2, 4, 16, 16), dtype=jnp.float32).astype(jnp.bfloat16)
    y4 = jax.block_until_ready(drop_path(x4, 0.25, True, True, key=k_mask4))
    y4_ref = ref_drop_path(x4, k_mask4, 0.25)
    assert jnp.allclose(y4.astype(jnp.float32), y4_ref.astype(jnp.float32),
                        rtol=1e-2, atol=1e-2), "bf16 mismatch"

    # 5) drop_prob == 1.0 -> all samples dropped (zeros), matching timm.
    x5 = jax.random.normal(k_x5, (2, 4, 16, 16), dtype=jnp.float32)
    y5 = jax.block_until_ready(drop_path(x5, 1.0, True, True, key=k_mask5))
    assert jnp.allclose(y5, jnp.zeros_like(y5)), "drop_prob=1.0 must zero out"

    # 6) Eval mode / drop_prob == 0 -> identity (no kernel launch).
    module.training = False
    y_eval = jax.block_until_ready(module(x, key=k_mask))
    assert jnp.array_equal(y_eval, x), "eval mode must be identity"

    print("KERNEL_OK")
</pallas_src>

<mosaic_0001>
module attributes {stable_mosaic.version = 11 : i64} {
  func.func @_drop_path_kernel(%arg0: i32, %arg1: memref<8x1xf32, #tpu.memory_space<vmem>>, %arg2: memref<8x128xf32, #tpu.memory_space<vmem>>, %arg3: memref<8x128xf32, #tpu.memory_space<vmem>>) attributes {dimension_semantics = [#tpu.dimension_semantics<parallel>], iteration_bounds = array<i64: 2>, scalar_prefetch = 0 : i64, scratch_operands = 0 : i64, tpu.core_type = #tpu.core_type<tc>, window_params = [{pipeline_mode = #tpu.pipeline_mode<synchronous>, transform_indices = @transform_0, window_bounds = array<i64: 8, 1>}, {transform_indices = @transform_1, window_bounds = array<i64: 8, 128>}, {transform_indices = @transform_2, window_bounds = array<i64: 8, 128>}]} {
    %c0 = arith.constant 0 : index
    %c0_0 = arith.constant 0 : index
    %0 = vector.load %arg2[%c0, %c0_0] : memref<8x128xf32, #tpu.memory_space<vmem>>, vector<8x128xf32>
    %c0_1 = arith.constant 0 : index
    %c0_2 = arith.constant 0 : index
    %1 = vector.load %arg1[%c0_1, %c0_2] : memref<8x1xf32, #tpu.memory_space<vmem>>, vector<8x1xf32>
    %2 = vector.broadcast %1 : vector<8x1xf32> to vector<8x128xf32>
    %3 = arith.mulf %0, %2 : vector<8x128xf32>
    %c0_3 = arith.constant 0 : index
    %c0_4 = arith.constant 0 : index
    %4 = vector.load %arg3[%c0_3, %c0_4] : memref<8x128xf32, #tpu.memory_space<vmem>>, vector<8x128xf32>
    tpu.vector_store %arg3[%c0_3, %c0_4], %3 {strides = array<i32>} : memref<8x128xf32, #tpu.memory_space<vmem>>, vector<8x128xf32>,
    return
  }
  func.func @transform_0(%arg0: i32) -> (i32, i32) {
    %c0_i32 = arith.constant 0 : i32
    %c0_i32_0 = arith.constant 0 : i32
    %c0_i32_1 = arith.constant 0 : i32
    return %c0_i32, %c0_i32_0 : i32, i32
  }
  func.func @transform_1(%arg0: i32) -> (i32, i32) {
    %c0_i32 = arith.constant 0 : i32
    %c0_i32_0 = arith.constant 0 : i32
    return %c0_i32, %arg0 : i32, i32
  }
  func.func @transform_2(%arg0: i32) -> (i32, i32) {
    %c0_i32 = arith.constant 0 : i32
    %c0_i32_0 = arith.constant 0 : i32
    return %c0_i32, %arg0 : i32, i32
  }
}

</mosaic_0001>

<llo_original>
// kernel: tpu_custom_call.1
$region0: #{tpu_custom_call.1}
  #allocation0 [shape = 'u32[]', space=smem, size = 0x4, offset = 0x4, fixed_abs, tag = 'smem constant byte address 0x4 - core index']
  #allocation1 [shape = 'u32[144,128]{1,0:T(1,128)}', space=vmem, size = 0x12000, scoped, tag = 'internal scratch']
  %s0 = inlined_call_operand.vmem [shape: f32[8,1], index: 0, kind: input, shape index: {}]
  %s1 = inlined_call_operand.hbm [shape: f32[8,256], index: 1, kind: input, shape index: {}]
  %s2 = inlined_call_operand.hbm [shape: f32[8,256], index: 2, kind: output, shape index: {}]
  %s3 = sld [smem:[#allocation0]]
  $region45: #{tpu_custom_call.1} parent=0
    _
  %s5 = ssub.s32 1, %s3
  %s6 = scalar_select 0, %s5, %s3
  $region1: #{tpu_custom_call.1} parent=0
    #allocation2 [shape = 'u8[8192]{0}', space=vmem, size = 0x2000, scoped, tag = 'input window, operand 1']
    #allocation3 [shape = 's32[2]{0}', space=sflag, size = 0x8, scoped, tag = 'scoped memory for tpu_custom_call.1']
    #allocation4 [shape = 's32[2]{0}', space=sflag, size = 0x8, scoped, tag = 'scoped memory for tpu_custom_call.1']
    #allocation5 [shape = 'u8[8192]{0}', space=vmem, size = 0x2000, scoped, tag = 'output window, operand 0']
    %7 = vsyncpa [#allocation3], 0
    %s8 = scalar_lea.sflag [#allocation3], 1
    %9 = vsyncpa %s8, 0
    %10 = vsyncpa [#allocation4], 0
    %s11 = scalar_lea.sflag [#allocation4], 1
    %12 = vsyncpa %s11, 0
    loop: start=0, step=1, limit=4
    $region2: #{tpu_custom_call.1} parent=1 // loop_pre_header
      _
    $region3: #{tpu_custom_call.1} parent=1 // loop_header
      %s14 = sphi 0, %s18
      %p15 = scmp.ge.s32.totalorder %s14, 4
      %s22 = sphi 0, %s22
      %s24 = sphi 0, %s22
      %s25 = sphi 0, %s24
      %s39 = sphi 0, %s25
      %s45 = sphi 0, %s47
      %s48 = sphi 0, %s45
      %s49 = sphi 0, %s48
      %s65 = sphi 0, %s49
      %s71 = sphi 0, %s73
      %s74 = sphi 0, %s71
      %s75 = sphi 0, %s74
      %s91 = sphi 0, %s75
    $region4: #{tpu_custom_call.1} parent=1 // loop_header_branch
      %17 = sbr.rel (%p15) target = $region8
    $region5: #{tpu_custom_call.1} parent=1 // loop_body
      %s19 = ssub.s32 %s14, 1
      %s20 = ssub.s32 %s14, 2
      %s21 = sadd.s32 %s14, 1
      %s23 = sadd.s32 %s22, 1
      %p26 = scmp.eq.s32.totalorder %s14, 1
      %p27 = scmp.ne.s32.totalorder %s22, %s24
      %p28 = scmp.eq.s32.totalorder %s14, 0
      %p29 = por %p27, %p28
      %p30 = scmp.ne.s32.totalorder %s22, %s24
      %p31 = scmp.eq.s32.totalorder %s19, 1
      %p32 = por %p30, %p31
      %p33 = scmp.ne.s32.totalorder %s24, %s25
      %p34 = scmp.eq.s32.totalorder %s19, 0
      %p35 = por %p33, %p34
      %p36 = scmp.ne.s32.totalorder %s24, %s25
      %p37 = scmp.eq.s32.totalorder %s20, 1
      %p38 = por %p36, %p37
      %p40 = scmp.ne.s32.totalorder %s25, %s39
      %p41 = scmp.eq.s32.totalorder %s20, 0
      %p42 = por %p40, %p41
      %s43 = ssub.s32 %s14, %s21
      %p44 = scmp.eq.s32.totalorder %s43, 0
      %s46 = sadd.s32 %s45, 1
      %s47 = scalar_select %p44, %s45, %s46
      %p50 = pneg %p44
      %p51 = scmp.eq.s32.totalorder %s14, 1
      %p52 = por %p50, %p51
      %p53 = scmp.ne.s32.totalorder %s45, %s48
      %p54 = scmp.eq.s32.totalorder %s14, 0
      %p55 = por %p53, %p54
      %p56 = scmp.ne.s32.totalorder %s45, %s48
      %p57 = scmp.eq.s32.totalorder %s19, 1
      %p58 = por %p56, %p57
      %p59 = scmp.ne.s32.totalorder %s48, %s49
      %p60 = scmp.eq.s32.totalorder %s19, 0
      %p61 = por %p59, %p60
      %p62 = scmp.ne.s32.totalorder %s48, %s49
      %p63 = scmp.eq.s32.totalorder %s20, 1
      %p64 = por %p62, %p63
      %p66 = scmp.ne.s32.totalorder %s49, %s65
      %p67 = scmp.eq.s32.totalorder %s20, 0
      %p68 = por %p66, %p67
      %s69 = ssub.s32 %s14, %s21
      %p70 = scmp.eq.s32.totalorder %s69, 0
      %s72 = sadd.s32 %s71, 1
      %s73 = scalar_select %p70, %s71, %s72
      %p76 = pneg %p70
      %p77 = scmp.eq.s32.totalorder %s14, 1
      %p78 = por %p76, %p77
      %p79 = scmp.ne.s32.totalorder %s71, %s74
      %p80 = scmp.eq.s32.totalorder %s14, 0
      %p81 = por %p79, %p80
      %p82 = scmp.ne.s32.totalorder %s71, %s74
      %p83 = scmp.eq.s32.totalorder %s19, 1
      %p84 = por %p82, %p83
      %p85 = scmp.ne.s32.totalorder %s74, %s75
      %p86 = scmp.eq.s32.totalorder %s19, 0
      %p87 = por %p85, %p86
      %p88 = scmp.ne.s32.totalorder %s74, %s75
      %p89 = scmp.eq.s32.totalorder %s20, 1
      %p90 = por %p88, %p89
      %p92 = scmp.ne.s32.totalorder %s75, %s91
      %p93 = scmp.eq.s32.totalorder %s20, 0
      %p94 = por %p92, %p93
      %p95 = scmp.le.s32.totalorder 1, %s14
      %p96 = scmp.lt.s32.totalorder %s14, 3
      %p97 = pnand %p95, %p96
      %p98 = pneg %p97
      // Predicated region
      $region9: #{tpu_custom_call.1} parent=5 // pred_check
        _
      $region10: #{tpu_custom_call.1} parent=5 // pred_check_branch
        %100 = sbr.rel (%p97) target = $region12
      $region11: #{tpu_custom_call.1} parent=5 // pred_region
        %s101 = ssub.s32 %s14, 1
        // Predicated region
        $region13: #{tpu_custom_call.1} parent=11 // pred_check
          %p102 = pneg %p35
        $region14: #{tpu_custom_call.1} parent=11 // pred_check_branch
          %104 = sbr.rel (%p102) target = $region16
        $region15: #{tpu_custom_call.1} parent=11 // pred_region
          _
        $region16: #{tpu_custom_call.1} parent=11 // pred_fallthru
          _
      $region12: #{tpu_custom_call.1} parent=5 // pred_fallthru
        _
      %p105 = scmp.lt.s32.totalorder %s14, 2
      // Predicated region
      $region17: #{tpu_custom_call.1} parent=5 // pred_check
        %p106 = pneg %p105
      $region18: #{tpu_custom_call.1} parent=5 // pred_check_branch
        %108 = sbr.rel (%p106) target = $region20
      $region19: #{tpu_custom_call.1} parent=5 // pred_region
        // Predicated region
        $region21: #{tpu_custom_call.1} parent=19 // pred_check
          %p109 = pneg %p55
        $region22: #{tpu_custom_call.1} parent=19 // pred_check_branch
          %111 = sbr.rel (%p109) target = $region24
        $region23: #{tpu_custom_call.1} parent=19 // pred_region
          %s112 = sand.u32 %s45, 1
          %s113 = scalar_lea.sflag [#allocation3], %s112
          %s114 = sand.u32 %s45, 1
          %s115 = smul.addr %s114, 8
          %s116 = scalar_lea.vmem [#allocation2], %s115
          %s118 = ssub.s32 128, 128
          %119 = vsyncadd %s113, %s118
          %s120 = smul.addr %s14, 128
          %s121 = scalar_lea.hbm %s1, %s120
          %s123 = sshll.u32 %s116, 4
          %s124 = int_to_ptr.vmem [resolvable:$true] %s123
          %126 = dma.hbm_to_vmem [thread:$0]  %s121, 128, %s124, %s113
        $region24: #{tpu_custom_call.1} parent=19 // pred_fallthru
          _
      $region20: #{tpu_custom_call.1} parent=5 // pred_fallthru
        _
      %p127 = scmp.le.s32.totalorder 1, %s14
      %p128 = scmp.lt.s32.totalorder %s14, 3
      %p129 = pnand %p127, %p128
      %p130 = pneg %p129
      // Predicated region
      $region25: #{tpu_custom_call.1} parent=5 // pred_check
        _
      $region26: #{tpu_custom_call.1} parent=5 // pred_check_branch
        %132 = sbr.rel (%p129) target = $region28
      $region27: #{tpu_custom_call.1} parent=5 // pred_region
        %s133 = ssub.s32 %s14, 1
        %s134 = sand.u32 %s48, 1
        %s135 = scalar_lea.sflag [#allocation3], %s134
        %s136 = sand.u32 %s48, 1
        %s137 = smul.addr %s136, 8
        %s138 = scalar_lea.vmem [#allocation2], %s137
        // Predicated region
        $region29: #{tpu_custom_call.1} parent=27 // pred_check
          %p139 = pneg %p61
        $region30: #{tpu_custom_call.1} parent=27 // pred_check_branch
          %141 = sbr.rel (%p139) target = $region32
        $region31: #{tpu_custom_call.1} parent=27 // pred_region
          %142 = dma.done %s135, 128
        $region32: #{tpu_custom_call.1} parent=27 // pred_fallthru
          _
        %p143 = pneg %p35
        %p144 = pneg %p32
        %s145 = sand.u32 %s48, 1
        %s146 = scalar_lea.sflag [#allocation3], %s145
        %s147 = sand.u32 %s48, 1
        %s148 = smul.addr %s147, 8
        %s149 = scalar_lea.vmem [#allocation2], %s148
        %p150 = pneg %p61
        %p151 = pneg %p58
        %p152 = pneg %p87
        %p153 = pneg %p84
        %s154 = sand.u32 %s74, 1
        %s155 = scalar_lea.sflag [#allocation4], %s154
        %s156 = sand.u32 %s74, 1
        %s157 = smul.addr %s156, 8
        %s158 = scalar_lea.vmem [#allocation5], %s157
        %v159 = vld [vmem:[%s138] sm:$0xff]
        %v160 = vld [vmem:[%s0] sm:$0xff]
        %162 = vset.pattern.permute.xlu0 0
        %163 = vperm.xlu0 %162, %v160
        %v164 = vpop.permute.xlu0 %163
        %v166 = vmul.f32 %v159, %v164
        %167 = vst [vmem:[%s158] sm:$0xff] %v166
        %s168 = sand.u32 %s74, 1
        %s169 = scalar_lea.sflag [#allocation4], %s168
        %s170 = sand.u32 %s74, 1
        %s171 = smul.addr %s170, 8
        %s172 = scalar_lea.vmem [#allocation5], %s171
        // Predicated region
        $region33: #{tpu_custom_call.1} parent=27 // pred_check
          %p173 = pneg %p84
        $region34: #{tpu_custom_call.1} parent=27 // pred_check_branch
          %175 = sbr.rel (%p173) target = $region36
        $region35: #{tpu_custom_call.1} parent=27 // pred_region
          %s177 = ssub.s32 128, 128
          %178 = vsyncadd %s169, %s177
          %s179 = smul.addr %s19, 128
          %s180 = scalar_lea.hbm %s2, %s179
          %s182 = sshll.u32 %s172, 4
          %s183 = int_to_ptr.vmem [resolvable:$true] %s182
          %185 = dma.vmem_to_hbm [thread:$0]  %s183, 128, %s180, %s169
        $region36: #{tpu_custom_call.1} parent=27 // pred_fallthru
          _
      $region28: #{tpu_custom_call.1} parent=5 // pred_fallthru
        _
      %p186 = scmp.le.s32.totalorder 2, %s14
      // Predicated region
      $region37: #{tpu_custom_call.1} parent=5 // pred_check
        %p187 = pneg %p186
      $region38: #{tpu_custom_call.1} parent=5 // pred_check_branch
        %189 = sbr.rel (%p187) target = $region40
      $region39: #{tpu_custom_call.1} parent=5 // pred_region
        %s190 = ssub.s32 %s14, 2
        // Predicated region
        $region41: #{tpu_custom_call.1} parent=39 // pred_check
          %p191 = pneg %p90
        $region42: #{tpu_custom_call.1} parent=39 // pred_check_branch
          %193 = sbr.rel (%p191) target = $region44
        $region43: #{tpu_custom_call.1} parent=39 // pred_region
          %s194 = sand.u32 %s75, 1
          %s195 = scalar_lea.sflag [#allocation4], %s194
          %s196 = sand.u32 %s75, 1
          %s197 = smul.addr %s196, 8
          %s198 = scalar_lea.vmem [#allocation5], %s197
          %199 = dma.done %s195, 128
        $region44: #{tpu_custom_call.1} parent=39 // pred_fallthru
          _
      $region40: #{tpu_custom_call.1} parent=5 // pred_fallthru
        _
    $region6: #{tpu_custom_call.1} parent=1 // loop_footer
      %s18 = sadd.s32 1, %s14
    $region7: #{tpu_custom_call.1} parent=1 // loop_footer_branch
      %13 = sbr.rel target = $region3
    $region8: #{tpu_custom_call.1} parent=1 // loop_exit
      _
    %200 = vsyncpa [#allocation3], 1
    %s201 = scalar_lea.sflag [#allocation3], 1
    %202 = vsyncpa %s201, 1
    %203 = vsyncpa [#allocation4], 1
    %s204 = scalar_lea.sflag [#allocation4], 1
    %205 = vsyncpa %s204, 1

</llo_original>
